<compile_context>
chip_gen: v5e
topology: v5e:2x2
jax: 0.10.0
libtpu: 0.0.40
codegen_flags: <defaults>
</compile_context>

<pallas_src>
import jax
import jax.numpy as jnp
from jax.experimental import pallas as pl
from jax.experimental.pallas import tpu as pltpu


def _residual_conv1x1_kernel(w_ref, b_ref, x_ref, o_ref):
    """out = W @ x + b + x on one lane-dense (C, t_hw) spatial tile.

    w_ref : VMEM (C, C)     f32 (bf16 for very large C), resident
    b_ref : VMEM (C, 1)     f32, resident
    x_ref : VMEM (1, C, t_hw)
    o_ref : VMEM (1, C, t_hw)
    """
    x = x_ref[0]                                              # (C, t_hw)
    y = jnp.dot(w_ref[...], x.astype(w_ref.dtype),
                preferred_element_type=jnp.float32)           # MXU
    o_ref[0] = (y + b_ref[...] + x.astype(jnp.float32)).astype(o_ref.dtype)


def _pick_spatial_tile(hw, c, n_batch, *, bytes_per_elem=4,
                       block_budget_bytes=4 * 1024 * 1024, min_grid_steps=4):
    """Pick the lane (spatial) tile.

    Rules:
      * full dim if hw <= 128 (always a legal block shape),
      * otherwise a multiple of 128, preferring one that divides hw exactly
        (no masked remainder tile -> unmasked vst on the store slot),
      * capped by a per-block VMEM budget (Pallas double-buffers in + out, so
        steady state ~= 4x this budget + resident weight/bias),
      * shrunk if needed so the grid has >= min_grid_steps steps total
        (v7x megacore sharding + i+1 prefetch overlap).
    """
    if hw <= 128:
        return hw

    c_pad = ((c + 7) // 8) * 8                    # f32 sublane padding
    max_lanes = max(128, (block_budget_bytes // (bytes_per_elem * c_pad))
                    // 128 * 128)
    limit = max(128, min(hw, max_lanes) // 128 * 128)

    divisors = [t for t in range(128, limit + 1, 128) if hw % t == 0]
    t_hw = max(divisors) if divisors else limit

    # Megacore / pipeline occupancy.
    while n_batch * (-(-hw // t_hw)) < min_grid_steps and t_hw > 128:
        smaller = [t for t in divisors if t < t_hw]
        t_hw = max(smaller) if smaller else max(128, (t_hw // 2) // 128 * 128)
    return t_hw


def residual_pointwise(x_nchw, weight, bias, *,
                       block_budget_bytes=4 * 1024 * 1024):
    """out = conv1x1(x; weight, bias) + x, fused in one Pallas kernel.

    x_nchw : (N, C, *spatial) float32   (e.g. (N, C, H, W) or (N, C, HW))
    weight : (C, C) float32             (1x1 conv kernel squeezed)
    bias   : (C,)   float32
    """
    N, C = x_nchw.shape[0], x_nchw.shape[1]
    HW = 1
    for d in x_nchw.shape[2:]:
        HW *= d

    # Flatten spatial dims so the kernel sees a lane-dense (C, HW) slab.
    # If the minor spatial dim is not a multiple of 128 this reshape may not
    # be a pure bitcast under TPU tiled layouts; pass (N, C, HW) activations
    # directly to avoid any relayout around the kernel.
    x3d = x_nchw.reshape(N, C, HW)

    t_hw = _pick_spatial_tile(HW, C, N, block_budget_bytes=block_budget_bytes)
    n_hw = pl.cdiv(HW, t_hw)

    c_pad = ((C + 7) // 8) * 8
    cost = pl.CostEstimate(
        flops=2 * N * HW * C * C + 2 * N * HW * C,
        transcendentals=0,
        # account for sublane padding of tiny C (real traffic floor)
        bytes_accessed=2 * N * c_pad * HW * 4 + C * C * 4 + C * 4,
    )

    # bf16 weights only where the f32 MXU rate could bind; f32 accumulation
    # (preferred_element_type) and f32 bias/residual adds are kept regardless.
    w_dtype = jnp.bfloat16 if C >= 256 else jnp.float32
    w_arg = weight.astype(w_dtype)
    b_arg = bias.astype(jnp.float32).reshape(C, 1)

    out3d = pl.pallas_call(
        _residual_conv1x1_kernel,
        out_shape=jax.ShapeDtypeStruct((N, C, HW), x_nchw.dtype),
        grid=(N, n_hw),
        in_specs=[
            pl.BlockSpec((C, C), lambda n, j: (0, 0)),        # resident weight
            pl.BlockSpec((C, 1), lambda n, j: (0, 0)),        # resident bias
            pl.BlockSpec((1, C, t_hw), lambda n, j: (n, 0, j)),
        ],
        out_specs=pl.BlockSpec((1, C, t_hw), lambda n, j: (n, 0, j)),
        compiler_params=pltpu.CompilerParams(
            dimension_semantics=("parallel", "parallel"),
            # steady state ~= 4 x block_budget + resident weight; 32 MiB is
            # safe on v5e/v6e (128 MiB physical) and v7x (64 MiB physical).
            vmem_limit_bytes=32 * 1024 * 1024,
        ),
        cost_estimate=cost,
    )(w_arg, b_arg, x3d)

    return out3d.reshape(x_nchw.shape)


if __name__ == "__main__":
    key = jax.random.PRNGKey(0)
    kx, kw, kb = jax.random.split(key, 3)

    N, C, H, W = 2, 4, 16, 16
    x = jax.random.normal(kx, (N, C, H, W), dtype=jnp.float32)

    # Deterministic parameters for fn = Conv2d(C, C, 1): weight (C, C), bias (C,)
    fan_in = C  # 1x1 kernel
    bound = 1.0 / (fan_in ** 0.5)
    weight = jax.random.uniform(kw, (C, C), jnp.float32, -bound, bound)
    bias = jax.random.uniform(kb, (C,), jnp.float32, -bound, bound)

    fn = jax.jit(residual_pointwise)
    out = fn(x, weight, bias)
    out = jax.block_until_ready(out)

    # Pure-JAX reference: 1x1 conv (channel matmul) + residual
    ref = jnp.einsum("nchw,oc->nohw", x, weight) + bias[None, :, None, None] + x
    assert out.shape == (N, C, H, W)
    assert jnp.allclose(out, ref, atol=1e-5, rtol=1e-5)

    print("KERNEL_OK")
</pallas_src>

<mosaic_0001>
module attributes {stable_mosaic.version = 11 : i64} {
  func.func @_residual_conv1x1_kernel(%arg0: i32, %arg1: i32, %arg2: memref<4x4xf32, #tpu.memory_space<vmem>>, %arg3: memref<4x1xf32, #tpu.memory_space<vmem>>, %arg4: memref<1x4x128xf32, #tpu.memory_space<vmem>>, %arg5: memref<1x4x128xf32, #tpu.memory_space<vmem>>) attributes {dimension_semantics = [#tpu.dimension_semantics<parallel>, #tpu.dimension_semantics<parallel>], iteration_bounds = array<i64: 2, 2>, scalar_prefetch = 0 : i64, scratch_operands = 0 : i64, tpu.core_type = #tpu.core_type<tc>, window_params = [{pipeline_mode = #tpu.pipeline_mode<synchronous>, transform_indices = @transform_0, window_bounds = array<i64: 4, 4>}, {pipeline_mode = #tpu.pipeline_mode<synchronous>, transform_indices = @transform_1, window_bounds = array<i64: 4, 1>}, {transform_indices = @transform_2, window_bounds = array<i64: 1, 4, 128>}, {transform_indices = @transform_3, window_bounds = array<i64: 1, 4, 128>}]} {
    %c0 = arith.constant 0 : index
    %c0_0 = arith.constant 0 : index
    %c0_1 = arith.constant 0 : index
    %0 = vector.load %arg4[%c0, %c0_0, %c0_1] : memref<1x4x128xf32, #tpu.memory_space<vmem>>, vector<1x4x128xf32>
    %1 = vector.shape_cast %0 : vector<1x4x128xf32> to vector<4x128xf32>
    %c0_2 = arith.constant 0 : index
    %c0_3 = arith.constant 0 : index
    %2 = vector.load %arg2[%c0_2, %c0_3] : memref<4x4xf32, #tpu.memory_space<vmem>>, vector<4x4xf32>
    %cst = arith.constant dense<0.000000e+00> : vector<4x128xf32>
    %3 = tpu.matmul %2, %1, %cst {dimension_numbers = #tpu.dot_dimension_numbers<[1], [0], [0], [1], [0, 0, 1, 1], [], []>} : vector<4x4xf32>, vector<4x128xf32>, vector<4x128xf32> -> vector<4x128xf32>
    %c0_4 = arith.constant 0 : index
    %c0_5 = arith.constant 0 : index
    %4 = vector.load %arg3[%c0_4, %c0_5] : memref<4x1xf32, #tpu.memory_space<vmem>>, vector<4x1xf32>
    %5 = vector.broadcast %4 : vector<4x1xf32> to vector<4x128xf32>
    %6 = arith.addf %3, %5 : vector<4x128xf32>
    %7 = arith.addf %6, %1 : vector<4x128xf32>
    %c0_6 = arith.constant 0 : index
    %c0_7 = arith.constant 0 : index
    %c0_8 = arith.constant 0 : index
    %8 = vector.load %arg5[%c0_6, %c0_7, %c0_8] : memref<1x4x128xf32, #tpu.memory_space<vmem>>, vector<1x4x128xf32>
    %9 = vector.shape_cast %8 : vector<1x4x128xf32> to vector<4x128xf32>
    %10 = vector.shape_cast %7 : vector<4x128xf32> to vector<1x4x128xf32>
    tpu.vector_store %arg5[%c0_6, %c0_7, %c0_8], %10 {strides = array<i32>} : memref<1x4x128xf32, #tpu.memory_space<vmem>>, vector<1x4x128xf32>,
    return
  }
  func.func @transform_0(%arg0: i32, %arg1: i32) -> (i32, i32) {
    %c0_i32 = arith.constant 0 : i32
    %c0_i32_0 = arith.constant 0 : i32
    %c0_i32_1 = arith.constant 0 : i32
    return %c0_i32, %c0_i32_0 : i32, i32
  }
  func.func @transform_1(%arg0: i32, %arg1: i32) -> (i32, i32) {
    %c0_i32 = arith.constant 0 : i32
    %c0_i32_0 = arith.constant 0 : i32
    %c0_i32_1 = arith.constant 0 : i32
    return %c0_i32, %c0_i32_0 : i32, i32
  }
  func.func @transform_2(%arg0: i32, %arg1: i32) -> (i32, i32, i32) {
    %c0_i32 = arith.constant 0 : i32
    %c0_i32_0 = arith.constant 0 : i32
    return %arg0, %c0_i32, %arg1 : i32, i32, i32
  }
  func.func @transform_3(%arg0: i32, %arg1: i32) -> (i32, i32, i32) {
    %c0_i32 = arith.constant 0 : i32
    %c0_i32_0 = arith.constant 0 : i32
    return %arg0, %c0_i32, %arg1 : i32, i32, i32
  }
}

</mosaic_0001>

<llo_original>
// kernel: residual_pointwise.1
$region0: #{residual_pointwise.1}
  #allocation0 [shape = 'u32[]', space=smem, size = 0x4, offset = 0x4, fixed_abs, tag = 'smem constant byte address 0x4 - core index']
  #allocation1 [shape = 'u32[72,128]{1,0:T(1,128)}', space=vmem, size = 0x9000, scoped, tag = 'internal scratch']
  %s0 = inlined_call_operand.vmem [shape: f32[4,4], index: 0, kind: input, shape index: {}]
  %s1 = inlined_call_operand.vmem [shape: f32[4,1], index: 1, kind: input, shape index: {}]
  %s2 = inlined_call_operand.vmem [shape: f32[2,4,256], index: 2, kind: input, shape index: {}]
  %s3 = inlined_call_operand.vmem [shape: f32[2,4,256], index: 3, kind: output, shape index: {}]
  %s4 = sld [smem:[#allocation0]]
  $region45: #{residual_pointwise.1} parent=0
    _
  %s6 = ssub.s32 1, %s4
  %s7 = scalar_select 0, %s6, %s4
  loop: start=0, step=1, limit=6
  $region2: #{residual_pointwise.1} parent=0 // loop_pre_header
    _
  $region3: #{residual_pointwise.1} parent=0 // loop_header
    %s9 = sphi 0, %s13
    %p10 = scmp.ge.s32.totalorder %s9, 6
    %s16 = sphi 0, %s28
    %s17 = sphi 0, %s24
    %s18 = sphi 0, %s16
    %s19 = sphi 0, %s17
    %s20 = sphi 0, %s18
    %s21 = sphi 0, %s19
    %s29 = sphi 0, %s29
    %s31 = sphi 0, %s29
    %s32 = sphi 0, %s31
    %s46 = sphi 0, %s32
    %s50 = sphi 0, %s50
    %s52 = sphi 0, %s50
    %s53 = sphi 0, %s52
    %s67 = sphi 0, %s53
    %s75 = sphi 0, %s77
    %s78 = sphi 0, %s75
    %s79 = sphi 0, %s78
    %s95 = sphi 0, %s79
    %s103 = sphi 0, %s105
    %s106 = sphi 0, %s103
    %s107 = sphi 0, %s106
    %s123 = sphi 0, %s107
  $region4: #{residual_pointwise.1} parent=0 // loop_header_branch
    %12 = sbr.rel (%p10) target = $region8
  $region5: #{residual_pointwise.1} parent=0 // loop_body
    %s14 = ssub.s32 %s9, 1
    %s15 = ssub.s32 %s9, 2
    %s22 = sadd.s32 1, %s17
    %p23 = scmp.ge.s32.totalorder %s22, 2
    %s24 = scalar_select %p23, 0, %s22
    %s25 = sadd.s32 1, %s16
    %s26 = scalar_select %p23, %s25, %s16
    %p27 = scmp.ge.s32.totalorder %s26, 2
    %s28 = scalar_select %p27, 0, %s26
    %s30 = sadd.s32 %s29, 1
    %p33 = scmp.eq.s32.totalorder %s9, 3
    %p34 = scmp.ne.s32.totalorder %s29, %s31
    %p35 = scmp.eq.s32.totalorder %s9, 0
    %p36 = por %p34, %p35
    %p37 = scmp.ne.s32.totalorder %s29, %s31
    %p38 = scmp.eq.s32.totalorder %s14, 3
    %p39 = por %p37, %p38
    %p40 = scmp.ne.s32.totalorder %s31, %s32
    %p41 = scmp.eq.s32.totalorder %s14, 0
    %p42 = por %p40, %p41
    %p43 = scmp.ne.s32.totalorder %s31, %s32
    %p44 = scmp.eq.s32.totalorder %s15, 3
    %p45 = por %p43, %p44
    %p47 = scmp.ne.s32.totalorder %s32, %s46
    %p48 = scmp.eq.s32.totalorder %s15, 0
    %p49 = por %p47, %p48
    %s51 = sadd.s32 %s50, 1
    %p54 = scmp.eq.s32.totalorder %s9, 3
    %p55 = scmp.ne.s32.totalorder %s50, %s52
    %p56 = scmp.eq.s32.totalorder %s9, 0
    %p57 = por %p55, %p56
    %p58 = scmp.ne.s32.totalorder %s50, %s52
    %p59 = scmp.eq.s32.totalorder %s14, 3
    %p60 = por %p58, %p59
    %p61 = scmp.ne.s32.totalorder %s52, %s53
    %p62 = scmp.eq.s32.totalorder %s14, 0
    %p63 = por %p61, %p62
    %p64 = scmp.ne.s32.totalorder %s52, %s53
    %p65 = scmp.eq.s32.totalorder %s15, 3
    %p66 = por %p64, %p65
    %p68 = scmp.ne.s32.totalorder %s53, %s67
    %p69 = scmp.eq.s32.totalorder %s15, 0
    %p70 = por %p68, %p69
    %s71 = ssub.s32 %s16, %s28
    %s72 = ssub.s32 %s17, %s24
    %s73 = sor.u32 %s71, %s72
    %p74 = scmp.eq.s32.totalorder %s73, 0
    %s76 = sadd.s32 %s75, 1
    %s77 = scalar_select %p74, %s75, %s76
    %p80 = pneg %p74
    %p81 = scmp.eq.s32.totalorder %s9, 3
    %p82 = por %p80, %p81
    %p83 = scmp.ne.s32.totalorder %s75, %s78
    %p84 = scmp.eq.s32.totalorder %s9, 0
    %p85 = por %p83, %p84
    %p86 = scmp.ne.s32.totalorder %s75, %s78
    %p87 = scmp.eq.s32.totalorder %s14, 3
    %p88 = por %p86, %p87
    %p89 = scmp.ne.s32.totalorder %s78, %s79
    %p90 = scmp.eq.s32.totalorder %s14, 0
    %p91 = por %p89, %p90
    %p92 = scmp.ne.s32.totalorder %s78, %s79
    %p93 = scmp.eq.s32.totalorder %s15, 3
    %p94 = por %p92, %p93
    %p96 = scmp.ne.s32.totalorder %s79, %s95
    %p97 = scmp.eq.s32.totalorder %s15, 0
    %p98 = por %p96, %p97
    %s99 = ssub.s32 %s16, %s28
    %s100 = ssub.s32 %s17, %s24
    %s101 = sor.u32 %s99, %s100
    %p102 = scmp.eq.s32.totalorder %s101, 0
    %s104 = sadd.s32 %s103, 1
    %s105 = scalar_select %p102, %s103, %s104
    %p108 = pneg %p102
    %p109 = scmp.eq.s32.totalorder %s9, 3
    %p110 = por %p108, %p109
    %p111 = scmp.ne.s32.totalorder %s103, %s106
    %p112 = scmp.eq.s32.totalorder %s9, 0
    %p113 = por %p111, %p112
    %p114 = scmp.ne.s32.totalorder %s103, %s106
    %p115 = scmp.eq.s32.totalorder %s14, 3
    %p116 = por %p114, %p115
    %p117 = scmp.ne.s32.totalorder %s106, %s107
    %p118 = scmp.eq.s32.totalorder %s14, 0
    %p119 = por %p117, %p118
    %p120 = scmp.ne.s32.totalorder %s106, %s107
    %p121 = scmp.eq.s32.totalorder %s15, 3
    %p122 = por %p120, %p121
    %p124 = scmp.ne.s32.totalorder %s107, %s123
    %p125 = scmp.eq.s32.totalorder %s15, 0
    %p126 = por %p124, %p125
    %p127 = scmp.le.s32.totalorder 1, %s9
    %p128 = scmp.lt.s32.totalorder %s9, 5
    %p129 = pnand %p127, %p128
    %p130 = pneg %p129
    // Predicated region
    $region9: #{residual_pointwise.1} parent=5 // pred_check
      _
    $region10: #{residual_pointwise.1} parent=5 // pred_check_branch
      %132 = sbr.rel (%p129) target = $region12
    $region11: #{residual_pointwise.1} parent=5 // pred_region
      %s133 = ssub.s32 %s9, 1
      // Predicated region
      $region13: #{residual_pointwise.1} parent=11 // pred_check
        %p134 = pneg %p42
      $region14: #{residual_pointwise.1} parent=11 // pred_check_branch
        %136 = sbr.rel (%p134) target = $region16
      $region15: #{residual_pointwise.1} parent=11 // pred_region
        _
      $region16: #{residual_pointwise.1} parent=11 // pred_fallthru
        _
      // Predicated region
      $region17: #{residual_pointwise.1} parent=11 // pred_check
        %p137 = pneg %p63
      $region18: #{residual_pointwise.1} parent=11 // pred_check_branch
        %139 = sbr.rel (%p137) target = $region20
      $region19: #{residual_pointwise.1} parent=11 // pred_region
        _
      $region20: #{residual_pointwise.1} parent=11 // pred_fallthru
        _
    $region12: #{residual_pointwise.1} parent=5 // pred_fallthru
      _
    %p140 = scmp.lt.s32.totalorder %s9, 4
    // Predicated region
    $region21: #{residual_pointwise.1} parent=5 // pred_check
      %p141 = pneg %p140
    $region22: #{residual_pointwise.1} parent=5 // pred_check_branch
      %143 = sbr.rel (%p141) target = $region24
    $region23: #{residual_pointwise.1} parent=5 // pred_region
      // Predicated region
      $region25: #{residual_pointwise.1} parent=23 // pred_check
        %p144 = pneg %p85
      $region26: #{residual_pointwise.1} parent=23 // pred_check_branch
        %146 = sbr.rel (%p144) target = $region28
      $region27: #{residual_pointwise.1} parent=23 // pred_region
        %p147 = scmp.lt.s32.totalorder %s16, 1
        %s148 = scalar_select %p147, %s16, 1
        %p149 = scmp.lt.s32.totalorder %s17, 1
        %s150 = scalar_select %p149, %s17, 1
        %s151 = smul.addr %s148, 2
        %s152 = sadd.s32 %s150, %s151
        %s153 = smul.addr %s152, 4
        %s154 = scalar_lea.vmem %s2, %s153
      $region28: #{residual_pointwise.1} parent=23 // pred_fallthru
        _
    $region24: #{residual_pointwise.1} parent=5 // pred_fallthru
      _
    %p155 = scmp.le.s32.totalorder 1, %s9
    %p156 = scmp.lt.s32.totalorder %s9, 5
    %p157 = pnand %p155, %p156
    %p158 = pneg %p157
    // Predicated region
    $region29: #{residual_pointwise.1} parent=5 // pred_check
      _
    $region30: #{residual_pointwise.1} parent=5 // pred_check_branch
      %160 = sbr.rel (%p157) target = $region32
    $region31: #{residual_pointwise.1} parent=5 // pred_region
      %s161 = ssub.s32 %s9, 1
      %p162 = pneg %p42
      %p163 = pneg %p39
      %p164 = pneg %p63
      %p165 = pneg %p60
      %p166 = scmp.lt.s32.totalorder %s18, 1
      %s167 = scalar_select %p166, %s18, 1
      %p168 = scmp.lt.s32.totalorder %s19, 1
      %s169 = scalar_select %p168, %s19, 1
      %s170 = smul.addr %s167, 2
      %s171 = sadd.s32 %s169, %s170
      %s172 = smul.addr %s171, 4
      %s173 = scalar_lea.vmem %s2, %s172
      %p174 = pneg %p91
      %p175 = pneg %p88
      %p176 = pneg %p119
      %p177 = pneg %p116
      %p178 = scmp.lt.s32.totalorder %s18, 1
      %s179 = scalar_select %p178, %s18, 1
      %p180 = scmp.lt.s32.totalorder %s19, 1
      %s181 = scalar_select %p180, %s19, 1
      %s182 = smul.addr %s179, 2
      %s183 = sadd.s32 %s181, %s182
      %s184 = smul.addr %s183, 4
      %s185 = scalar_lea.vmem %s3, %s184
      %p186 = scmp.lt.s32.totalorder %s18, 1
      %s187 = scalar_select %p186, %s18, 1
      %p188 = scmp.lt.s32.totalorder %s19, 1
      %s189 = scalar_select %p188, %s19, 1
      %s190 = smul.addr %s187, 2
      %s191 = sadd.s32 %s189, %s190
      %s192 = smul.addr %s191, 4
      %s193 = scalar_lea.vmem %s2, %s192
      %p194 = scmp.lt.s32.totalorder %s18, 1
      %s195 = scalar_select %p194, %s18, 1
      %p196 = scmp.lt.s32.totalorder %s19, 1
      %s197 = scalar_select %p196, %s19, 1
      %s198 = smul.addr %s195, 2
      %s199 = sadd.s32 %s197, %s198
      %s200 = smul.addr %s199, 4
      %s201 = scalar_lea.vmem %s3, %s200
      %v202 = vld [vmem:[%s193] sm:$0xf]
      %v203 = vld [vmem:[%s0] sm:$0xf]
      %v204 = vld [vmem:[%s1] sm:$0xf]
      %206 = vset.pattern.permute.xlu0 0
      %207 = vperm.xlu0 %206, %v204
      %v208 = vpop.permute.xlu0 %207
      %vm210 = vcmask 31744
      %v212 = vsel %vm210, %v203, 0
      %vm214 = vcmask 1043456
      %v216 = vsel %vm214, %v202, 0
      %218 = vmatpush.msra.mxu0 0.0
      %219 = vmatpush.msra.mxu0 0.0
      %220 = vmatpush.msra.mxu0 0.0
      %221 = vmatpush.msra.mxu0 0.0
      %222 = vmatpush.msra.mxu0 0.0
      %223 = vmatpush.msra.mxu0 0.0
      %224 = vmatpush.msra.mxu0 0.0
      %225 = vmatpush.msra.mxu0 0.0
      %226 = vmatpush.msra.mxu0 0.0
      %227 = vmatpush.msra.mxu0 0.0
      %228 = vmatpush.msra.mxu0 0.0
      %229 = vmatpush.msra.mxu0 0.0
      %230 = vmatpush.msra.mxu0 0.0
      %231 = vmatpush.msra.mxu0 0.0
      %232 = vmatpush.msra.mxu0 0.0
      %233 = vmatpush.msra.mxu0 %v216
      %234 = vmatmul.f32.gmra.mxu0 %v212
      %v235 = vpop.f32.mrf.mxu0
      %v236 = vadd.f32 %v208, %v235
      %237 = vdwg.mxu0
      %v238 = vadd.f32 %v236, %v202
      %239 = vst [vmem:[%s201] sm:$0xf] %v238
      %p240 = scmp.lt.s32.totalorder %s18, 1
      %s241 = scalar_select %p240, %s18, 1
      %p242 = scmp.lt.s32.totalorder %s19, 1
      %s243 = scalar_select %p242, %s19, 1
      %s244 = smul.addr %s241, 2
      %s245 = sadd.s32 %s243, %s244
      %s246 = smul.addr %s245, 4
      %s247 = scalar_lea.vmem %s3, %s246
      // Predicated region
      $region33: #{residual_pointwise.1} parent=31 // pred_check
        %p248 = pneg %p116
      $region34: #{residual_pointwise.1} parent=31 // pred_check_branch
        %250 = sbr.rel (%p248) target = $region36
      $region35: #{residual_pointwise.1} parent=31 // pred_region
        _
      $region36: #{residual_pointwise.1} parent=31 // pred_fallthru
        _
    $region32: #{residual_pointwise.1} parent=5 // pred_fallthru
      _
    %p251 = scmp.le.s32.totalorder 2, %s9
    // Predicated region
    $region37: #{residual_pointwise.1} parent=5 // pred_check
      %p252 = pneg %p251
    $region38: #{residual_pointwise.1} parent=5 // pred_check_branch
      %254 = sbr.rel (%p252) target = $region40
    $region39: #{residual_pointwise.1} parent=5 // pred_region
      %s255 = ssub.s32 %s9, 2
      // Predicated region
      $region41: #{residual_pointwise.1} parent=39 // pred_check
        %p256 = pneg %p122
      $region42: #{residual_pointwise.1} parent=39 // pred_check_branch
        %258 = sbr.rel (%p256) target = $region44
      $region43: #{residual_pointwise.1} parent=39 // pred_region
        %p259 = scmp.lt.s32.totalorder %s20, 1
        %s260 = scalar_select %p259, %s20, 1
        %p261 = scmp.lt.s32.totalorder %s21, 1
        %s262 = scalar_select %p261, %s21, 1
        %s263 = smul.addr %s260, 2
        %s264 = sadd.s32 %s262, %s263
        %s265 = smul.addr %s264, 4
        %s266 = scalar_lea.vmem %s3, %s265
      $region44: #{residual_pointwise.1} parent=39 // pred_fallthru
        _
    $region40: #{residual_pointwise.1} parent=5 // pred_fallthru
      _
  $region6: #{residual_pointwise.1} parent=0 // loop_footer
    %s13 = sadd.s32 1, %s9
  $region7: #{residual_pointwise.1} parent=0 // loop_footer_branch
    %8 = sbr.rel target = $region3
  $region8: #{residual_pointwise.1} parent=0 // loop_exit
    _

</llo_original>
